<compile_context>
chip_gen: v7x
topology: tpu7x:2x2x1
jax: 0.10.0
libtpu: 0.0.40
codegen_flags: <defaults>
</compile_context>

<pallas_src>
import functools

import jax
import jax.numpy as jnp
from jax.experimental import pallas as pl
from jax.experimental.pallas import tpu as pltpu


def _cdiv(a, b):
    return -(-a // b)


def _round_up(x, m):
    return _cdiv(x, m) * m


def _illuin_kernel(xqt_ref, xc_ref, poolT_ref, out_ref, *, cc, wc):
    """One grid step = one tile of CB contexts, processed in CC-context chunks."""
    cb, _ = out_ref.shape
    d, qw = xqt_ref.shape
    n_chunks = cb // cc

    xqt = xqt_ref[...]          # (D, QW) bf16 — resident across the whole grid
    poolT = poolT_ref[...]      # (QW, Q) f32  — block-diagonal pooling, resident

    def chunk(i, carry):
        start = pl.multiple_of(i * cc, cc)
        # (Wc, CC, D) chunk of the word-major Xc tile; CC % 8 == 0 keeps every
        # merge/split below a pure (8,128)-tile reinterpretation.
        xc_chunk = xc_ref[:, pl.ds(start, cc), :]
        # Scores for every (context word, question word) pair in the chunk:
        # (Wc*CC, D) x (D, QW) on the MXU, bf16 inputs, f32 accumulation.
        s = jax.lax.dot_general(
            xc_chunk.reshape(wc * cc, d), xqt,
            dimension_numbers=(((1,), (0,)), ((), ())),
            preferred_element_type=jnp.float32)                  # (Wc*CC, QW)
        # __smartMax: word-major layout => per-context max is an elementwise
        # VPU max across Wc slabs; result lands directly as (CC, QW).
        m = jnp.max(s.reshape(wc, cc, qw), axis=0)               # (CC, QW)
        # __smartMean: pooling matmul contracts lanes(m) x sublanes(poolT),
        # so no relayout/transpose of m is required.
        o = jax.lax.dot_general(
            m, poolT,
            dimension_numbers=(((1,), (0,)), ((), ())),
            preferred_element_type=jnp.float32)                  # (CC, Q)
        out_ref[pl.ds(start, cc), :] = o.astype(out_ref.dtype)
        return carry

    jax.lax.fori_loop(0, n_chunks, chunk, 0, unroll=n_chunks <= 8)


def illuin_forward(xq, xc, *, num_questions, words_per_question,
                   num_contexts, words_per_context, max_word=100,
                   context_block=None, context_chunk=None, use_bf16=True):
    Q, Wq, C, Wc = num_questions, words_per_question, num_contexts, words_per_context
    QW, D = xq.shape
    assert QW == Q * Wq and xc.shape == (C * Wc, D)

    # TODO(synk): when Wq > max_word the reference sorts each column of the
    # per-question slice descending and averages only the top max_word rows;
    # lax.sort has no clean Mosaic lowering, so only Wq <= max_word is handled.
    assert Wq <= max_word
    # TODO(synk): ragged per-context word counts (self.NC) are not handled;
    # padding words would need a -inf mask before the max, not zeros.
    x2 = min(Wq, max_word)

    in_dtype = jnp.bfloat16 if use_bf16 else jnp.float32
    isz = jnp.dtype(in_dtype).itemsize

    # ---- MXU/lane-friendly padding: D (contraction) and QW (result width). --
    D_pad = _round_up(D, 128)
    QW_pad = _round_up(QW, 128)

    # Question words pre-transposed to (D_pad, QW_pad): canonical (K, N) rhs.
    xqt = jnp.zeros((D_pad, QW_pad), in_dtype).at[:D, :QW].set(
        xq.astype(in_dtype).T)

    # mean_layer (all-ones weight) on identity-proj rows collapses to this
    # fixed block-diagonal pooling matrix; pre-transposed to (QW_pad, Q).
    poolT = jnp.kron(jnp.eye(Q, dtype=jnp.float32),
                     jnp.ones((Wq, 1), jnp.float32)) / float(x2)        # (QW, Q)
    poolT = jnp.zeros((QW_pad, Q), jnp.float32).at[:QW, :].set(poolT)

    # ---- per-generation budgets (VMEM capacity distinguishes v7x) -----------
    vmem_cap = 128 << 20
    try:
        info = pltpu.get_tpu_info()
        vmem_cap = int(getattr(info, "vmem_capacity_bytes", vmem_cap)) or vmem_cap
    except Exception:
        pass
    small_vmem = vmem_cap <= (64 << 20)                   # v7x-class (64 MiB/TC)
    xc_budget = (5 << 20) if small_vmem else (8 << 20)    # Xc bytes per pipeline buffer
    slab_budget = (1 << 20) if small_vmem else (2 << 20)  # live f32 score slab / chunk

    # ---- inner chunk CC: bounds the live f32 score slab (Wc*CC*QW_pad*4) ----
    C8 = _round_up(C, 8)
    if context_chunk is None:
        cc = max(8, (slab_budget // (Wc * QW_pad * 4)) // 8 * 8)
        cc = min(cc, C8)
    else:
        cc = context_chunk
    assert cc % 8 == 0

    # ---- outer tile CB: sized from the Xc-per-buffer budget, multiple of CC -
    if context_block is None:
        cb = max(cc, (xc_budget // (Wc * D_pad * isz)) // cc * cc)
        if cb >= C8:
            # Whole problem fits one tile; split into >=2 tiles when possible
            # so both v7x TensorCores get work under the "parallel" grid axis.
            cb = _round_up(_cdiv(C8, 2), cc) if C8 >= 2 * cc else _round_up(C8, cc)
    else:
        cb = context_block
    assert cb % cc == 0

    # Total-footprint model: double-buffered Xc/Xq/poolT/out + in-kernel slabs.
    def footprint(cb_):
        return (2 * Wc * cb_ * D_pad * isz          # Xc tile (double buffered)
                + 2 * D_pad * QW_pad * isz          # Xq (resident)
                + 2 * QW_pad * Q * 4                # poolT (resident)
                + 2 * cb_ * Q * 4                   # output tile
                + Wc * cc * QW_pad * 4              # f32 score slab
                + cc * QW_pad * 4 + cc * Q * 4)     # m + pooled chunk
    while footprint(cb) > (vmem_cap * 3) // 4 and cb > cc:
        cb = max(cc, (cb // 2) // cc * cc)

    num_tiles = _cdiv(C8, cb)
    C_pad = num_tiles * cb

    vmem_limit = int(min((vmem_cap * 3) // 4,
                         max(footprint(cb) + (8 << 20), 32 << 20)))

    # ---- word-major Xc: (Wc, C_pad, D_pad); padded contexts/dims are zero ---
    # (zero scores are sliced off below; they never mix with real contexts).
    xc_wm = jnp.zeros((Wc, C_pad, D_pad), in_dtype)
    xc_wm = xc_wm.at[:, :C, :D].set(
        jnp.transpose(xc.astype(in_dtype).reshape(C, Wc, D), (1, 0, 2)))

    grid_spec = pltpu.PrefetchScalarGridSpec(
        num_scalar_prefetch=0,
        grid=(num_tiles,),
        in_specs=[
            pl.BlockSpec((D_pad, QW_pad), lambda c: (0, 0)),     # question words (resident)
            pl.BlockSpec((Wc, cb, D_pad), lambda c: (0, c, 0)),  # this tile's contexts
            pl.BlockSpec((QW_pad, Q), lambda c: (0, 0)),         # pooling matrix (resident)
        ],
        out_specs=pl.BlockSpec((cb, Q), lambda c: (c, 0)),       # disjoint row tile
    )

    cost = pl.CostEstimate(
        flops=2 * C_pad * Wc * D_pad * QW_pad + 2 * C_pad * QW_pad * Q,
        transcendentals=0,
        bytes_accessed=int(xqt.size * isz + xc_wm.size * isz
                           + poolT.size * 4 + C_pad * Q * 4))

    out = pl.pallas_call(
        functools.partial(_illuin_kernel, cc=cc, wc=Wc),
        out_shape=jax.ShapeDtypeStruct((C_pad, Q), jnp.float32),
        grid_spec=grid_spec,
        compiler_params=pltpu.CompilerParams(
            dimension_semantics=("parallel",),
            vmem_limit_bytes=vmem_limit),
        cost_estimate=cost,
    )(xqt, xc_wm, poolT)

    # (C_pad, Q) -> (Q, C); the transpose/slice of this tiny result is wrapper
    # layout plumbing, not compute.
    return out[:C, :].T


def _reference(xq, xc, Q, Wq, C, Wc, max_word=100):
    """Pure-JAX mirror of IlluinNetwork.forward for uniform segment lengths."""
    s = xq @ xc.T                                   # X @ XC.T
    smax = s.reshape(Q * Wq, C, Wc).max(axis=-1)    # __smartMax
    x2 = min(Wq, max_word)
    per_q = smax.reshape(Q, Wq, C)
    top = -jnp.sort(-per_q, axis=1)[:, :x2, :]      # __smartMean top-x2 mean
    return top.mean(axis=1)


def _row_normalize(v):
    n = jnp.linalg.norm(v, axis=1, keepdims=True)
    n = jnp.where(n == 0, 1.0, n)
    return v / n


if __name__ == "__main__":
    Q, Wq = 2, 8           # 2 questions, 8 words each
    C, Wc = 4, 16          # 4 contexts, 16 words each
    D = 32                 # embedding dim (fasttext would be 300)
    MAX_WORD = 100         # module default

    key = jax.random.PRNGKey(0)
    kq, kc = jax.random.split(key)
    # VectorizeQuestion / fit_context produce row-normalized word embeddings;
    # the fasttext lookup itself is host-side string processing (not a kernel).
    xq = _row_normalize(jax.random.normal(kq, (Q * Wq, D), jnp.float32))
    xc = _row_normalize(jax.random.normal(kc, (C * Wc, D), jnp.float32))

    out = illuin_forward(xq, xc, num_questions=Q, words_per_question=Wq,
                         num_contexts=C, words_per_context=Wc, max_word=MAX_WORD)
    out = jax.block_until_ready(out)

    # The kernel feeds bf16 inputs to the MXU (f32 accumulation); validate the
    # kernel math against an identically quantized f32 reference.
    xq_q = xq.astype(jnp.bfloat16).astype(jnp.float32)
    xc_q = xc.astype(jnp.bfloat16).astype(jnp.float32)
    ref = _reference(xq_q, xc_q, Q, Wq, C, Wc, MAX_WORD)
    assert out.shape == (Q, C)
    assert jnp.allclose(out, ref, rtol=5e-4, atol=5e-4), (out, ref)
    print("KERNEL_OK")
</pallas_src>

<mosaic_0001>
module attributes {stable_mosaic.version = 11 : i64} {
  func.func @_illuin_kernel(%arg0: i32, %arg1: memref<128x128xbf16, #tpu.memory_space<vmem>>, %arg2: memref<16x8x128xbf16, #tpu.memory_space<vmem>>, %arg3: memref<128x2xf32, #tpu.memory_space<vmem>>, %arg4: memref<8x2xf32, #tpu.memory_space<vmem>>) attributes {dimension_semantics = [#tpu.dimension_semantics<parallel>], iteration_bounds = array<i64: 1>, scalar_prefetch = 0 : i64, scratch_operands = 0 : i64, tpu.core_type = #tpu.core_type<tc>, window_params = [{pipeline_mode = #tpu.pipeline_mode<synchronous>, transform_indices = @transform_0, window_bounds = array<i64: 128, 128>}, {transform_indices = @transform_1, window_bounds = array<i64: 16, 8, 128>}, {pipeline_mode = #tpu.pipeline_mode<synchronous>, transform_indices = @transform_2, window_bounds = array<i64: 128, 2>}, {transform_indices = @transform_3, window_bounds = array<i64: 8, 2>}]} {
    %c0 = arith.constant 0 : index
    %c0_0 = arith.constant 0 : index
    %0 = vector.load %arg1[%c0, %c0_0] : memref<128x128xbf16, #tpu.memory_space<vmem>>, vector<128x128xbf16>
    %c0_1 = arith.constant 0 : index
    %c0_2 = arith.constant 0 : index
    %1 = vector.load %arg3[%c0_1, %c0_2] : memref<128x2xf32, #tpu.memory_space<vmem>>, vector<128x2xf32>
    %c0_i32 = arith.constant 0 : i32
    %c8_i32 = arith.constant 8 : i32
    %2 = arith.muli %c0_i32, %c8_i32 : i32
    %3 = tpu.assume_multiple %2, 8 : i32
    %c0_3 = arith.constant 0 : index
    %4 = arith.index_cast %3 : i32 to index
    %c0_4 = arith.constant 0 : index
    %5 = vector.load %arg2[%c0_3, %4, %c0_4] : memref<16x8x128xbf16, #tpu.memory_space<vmem>>, vector<16x8x128xbf16>
    %6 = vector.shape_cast %5 : vector<16x8x128xbf16> to vector<128x128xbf16>
    %cst = arith.constant dense<0.000000e+00> : vector<128x128xf32>
    %7 = tpu.matmul %6, %0, %cst {dimension_numbers = #tpu.dot_dimension_numbers<[1], [0], [0], [1], [0, 0, 1, 1], [], []>} : vector<128x128xbf16>, vector<128x128xbf16>, vector<128x128xf32> -> vector<128x128xf32>
    %8 = vector.shape_cast %7 : vector<128x128xf32> to vector<16x8x128xf32>
    %cst_5 = arith.constant dense<0xFF800000> : vector<8x128xf32>
    %9 = vector.multi_reduction <maximumf>, %8, %cst_5 [0] : vector<16x8x128xf32> to vector<8x128xf32>
    %cst_6 = arith.constant dense<0.000000e+00> : vector<8x2xf32>
    %10 = tpu.matmul %9, %1, %cst_6 {dimension_numbers = #tpu.dot_dimension_numbers<[1], [0], [0], [1], [0, 0, 1, 1], [], []>} : vector<8x128xf32>, vector<128x2xf32>, vector<8x2xf32> -> vector<8x2xf32>
    %11 = arith.index_cast %3 : i32 to index
    %c0_7 = arith.constant 0 : index
    %12 = vector.load %arg4[%11, %c0_7] : memref<8x2xf32, #tpu.memory_space<vmem>>, vector<8x2xf32>
    tpu.vector_store %arg4[%11, %c0_7], %10 {strides = array<i32>} : memref<8x2xf32, #tpu.memory_space<vmem>>, vector<8x2xf32>,
    %c1_i32 = arith.constant 1 : i32
    return
  }
  func.func @transform_0(%arg0: i32) -> (i32, i32) {
    %c0_i32 = arith.constant 0 : i32
    %c0_i32_0 = arith.constant 0 : i32
    %c0_i32_1 = arith.constant 0 : i32
    return %c0_i32, %c0_i32_0 : i32, i32
  }
  func.func @transform_1(%arg0: i32) -> (i32, i32, i32) {
    %c0_i32 = arith.constant 0 : i32
    %c0_i32_0 = arith.constant 0 : i32
    %c0_i32_1 = arith.constant 0 : i32
    return %c0_i32, %arg0, %c0_i32_0 : i32, i32, i32
  }
  func.func @transform_2(%arg0: i32) -> (i32, i32) {
    %c0_i32 = arith.constant 0 : i32
    %c0_i32_0 = arith.constant 0 : i32
    %c0_i32_1 = arith.constant 0 : i32
    return %c0_i32, %c0_i32_0 : i32, i32
  }
  func.func @transform_3(%arg0: i32) -> (i32, i32) {
    %c0_i32 = arith.constant 0 : i32
    %c0_i32_0 = arith.constant 0 : i32
    return %arg0, %c0_i32 : i32, i32
  }
}

</mosaic_0001>

<llo_original>
// kernel: tpu_custom_call.1
$region0: #{tpu_custom_call.1}
  #allocation0 [shape = 'u32[]', space=smem, size = 0x4, offset = 0x4, fixed_abs, tag = 'smem constant byte address 0x4 - core index']
  #allocation1 [shape = 'u32[144,128]{1,0:T(1,128)}', space=vmem, size = 0x12000, scoped, tag = 'internal scratch']
  %s0 = inlined_call_operand.vmem [shape: bf16[128,128], index: 0, kind: input, shape index: {}]
  %s1 = inlined_call_operand.vmem [shape: bf16[16,8,128], index: 1, kind: input, shape index: {}]
  %s2 = inlined_call_operand.vmem [shape: f32[128,2], index: 2, kind: input, shape index: {}]
  %s3 = inlined_call_operand.vmem [shape: f32[8,2], index: 3, kind: output, shape index: {}]
  %s4 = sld [smem:[#allocation0]]
  $region22: #{tpu_custom_call.1} parent=0
    _
  %s6 = ssub.s32 1, %s4
  %s7 = scalar_select 0, %s6, %s4
  // Predicated region
  $region2: #{tpu_custom_call.1} parent=0 // pred_check
    _
  $region3: #{tpu_custom_call.1} parent=0 // pred_check_branch
    %9 = sbr.rel (0) target = $region5
  $region4: #{tpu_custom_call.1} parent=0 // pred_region
    _
  $region5: #{tpu_custom_call.1} parent=0 // pred_fallthru
    _
  // Predicated region
  $region6: #{tpu_custom_call.1} parent=0 // pred_check
    _
  $region7: #{tpu_custom_call.1} parent=0 // pred_check_branch
    %11 = sbr.rel (0) target = $region9
  $region8: #{tpu_custom_call.1} parent=0 // pred_region
    _
  $region9: #{tpu_custom_call.1} parent=0 // pred_fallthru
    _
  // Predicated region
  $region10: #{tpu_custom_call.1} parent=0 // pred_check
    _
  $region11: #{tpu_custom_call.1} parent=0 // pred_check_branch
    %13 = sbr.rel (0) target = $region13
  $region12: #{tpu_custom_call.1} parent=0 // pred_region
    _
  $region13: #{tpu_custom_call.1} parent=0 // pred_fallthru
    _
  %v15 = vld [vmem:[%s0] sm:$0xf]
  %v16 = vld [vmem:[%s0 + $0x4] sm:$0xf]
  %v17 = vld [vmem:[%s0 + $0x8] sm:$0xf]
  %v18 = vld [vmem:[%s0 + $0xc] sm:$0xf]
  %v19 = vld [vmem:[%s0 + $0x10] sm:$0xf]
  %v20 = vld [vmem:[%s0 + $0x14] sm:$0xf]
  %v21 = vld [vmem:[%s0 + $0x18] sm:$0xf]
  %v22 = vld [vmem:[%s0 + $0x1c] sm:$0xf]
  %v23 = vld [vmem:[%s0 + $0x20] sm:$0xf]
  %v24 = vld [vmem:[%s0 + $0x24] sm:$0xf]
  %v25 = vld [vmem:[%s0 + $0x28] sm:$0xf]
  %v26 = vld [vmem:[%s0 + $0x2c] sm:$0xf]
  %v27 = vld [vmem:[%s0 + $0x30] sm:$0xf]
  %v28 = vld [vmem:[%s0 + $0x34] sm:$0xf]
  %v29 = vld [vmem:[%s0 + $0x38] sm:$0xf]
  %v30 = vld [vmem:[%s0 + $0x3c] sm:$0xf]
  %v31 = vld [vmem:[%s2] sm:$0xff]
  %v32 = vld [vmem:[%s2 + $0x8] sm:$0xff]
  %v33 = vld [vmem:[%s2 + $0x10] sm:$0xff]
  %v34 = vld [vmem:[%s2 + $0x18] sm:$0xff]
  %v35 = vld [vmem:[%s2 + $0x20] sm:$0xff]
  %v36 = vld [vmem:[%s2 + $0x28] sm:$0xff]
  %v37 = vld [vmem:[%s2 + $0x30] sm:$0xff]
  %v38 = vld [vmem:[%s2 + $0x38] sm:$0xff]
  %v39 = vld [vmem:[%s2 + $0x40] sm:$0xff]
  %v40 = vld [vmem:[%s2 + $0x48] sm:$0xff]
  %v41 = vld [vmem:[%s2 + $0x50] sm:$0xff]
  %v42 = vld [vmem:[%s2 + $0x58] sm:$0xff]
  %v43 = vld [vmem:[%s2 + $0x60] sm:$0xff]
  %v44 = vld [vmem:[%s2 + $0x68] sm:$0xff]
  %v45 = vld [vmem:[%s2 + $0x70] sm:$0xff]
  %v46 = vld [vmem:[%s2 + $0x78] sm:$0xff]
  %v47 = vld [vmem:[%s1] sm:$0xf]
  %v48 = vld [vmem:[%s1 + $0x4] sm:$0xf]
  %v49 = vld [vmem:[%s1 + $0x8] sm:$0xf]
  %v50 = vld [vmem:[%s1 + $0xc] sm:$0xf]
  %v51 = vld [vmem:[%s1 + $0x10] sm:$0xf]
  %v52 = vld [vmem:[%s1 + $0x14] sm:$0xf]
  %v53 = vld [vmem:[%s1 + $0x18] sm:$0xf]
  %v54 = vld [vmem:[%s1 + $0x1c] sm:$0xf]
  %v55 = vld [vmem:[%s1 + $0x20] sm:$0xf]
  %v56 = vld [vmem:[%s1 + $0x24] sm:$0xf]
  %v57 = vld [vmem:[%s1 + $0x28] sm:$0xf]
  %v58 = vld [vmem:[%s1 + $0x2c] sm:$0xf]
  %v59 = vld [vmem:[%s1 + $0x30] sm:$0xf]
  %v60 = vld [vmem:[%s1 + $0x34] sm:$0xf]
  %v61 = vld [vmem:[%s1 + $0x38] sm:$0xf]
  %v62 = vld [vmem:[%s1 + $0x3c] sm:$0xf]
  %v79 = vunpack.c.l.b16 %v47
  %v80 = vunpack.c.l.b16 %v48
  %v81 = vunpack.c.l.b16 %v49
  %v82 = vunpack.c.l.b16 %v50
  %v83 = vunpack.c.l.b16 %v51
  %v84 = vunpack.c.l.b16 %v52
  %v85 = vunpack.c.l.b16 %v53
  %v86 = vunpack.c.l.b16 %v54
  %v87 = vunpack.c.l.b16 %v55
  %v88 = vunpack.c.l.b16 %v56
  %v89 = vunpack.c.l.b16 %v57
  %v90 = vunpack.c.l.b16 %v58
  %v91 = vunpack.c.l.b16 %v59
  %v92 = vunpack.c.l.b16 %v60
  %v93 = vunpack.c.l.b16 %v61
  %v94 = vunpack.c.l.b16 %v62
  %v95 = vpack.c.b16 %v80, %v79
  %v96 = vpack.c.b16 %v82, %v81
  %v97 = vpack.c.b16 %v84, %v83
  %v98 = vpack.c.b16 %v86, %v85
  %v99 = vpack.c.b16 %v88, %v87
  %v100 = vpack.c.b16 %v90, %v89
  %v101 = vpack.c.b16 %v92, %v91
  %v102 = vpack.c.b16 %v94, %v93
  %v127 = vunpack.c.l.b16 %v15
  %v128 = vunpack.c.l.b16 %v16
  %v129 = vunpack.c.l.b16 %v17
  %v130 = vunpack.c.l.b16 %v18
  %v131 = vunpack.c.l.b16 %v19
  %v132 = vunpack.c.l.b16 %v20
  %v133 = vunpack.c.l.b16 %v21
  %v134 = vunpack.c.l.b16 %v22
  %v135 = vunpack.c.l.b16 %v23
  %v136 = vunpack.c.l.b16 %v24
  %v137 = vunpack.c.l.b16 %v25
  %v138 = vunpack.c.l.b16 %v26
  %v139 = vunpack.c.l.b16 %v27
  %v140 = vunpack.c.l.b16 %v28
  %v141 = vunpack.c.l.b16 %v29
  %v142 = vunpack.c.l.b16 %v30
  %v143 = vpack.c.b16 %v128, %v127
  %v144 = vpack.c.b16 %v130, %v129
  %v145 = vpack.c.b16 %v132, %v131
  %v146 = vpack.c.b16 %v134, %v133
  %v147 = vpack.c.b16 %v136, %v135
  %v148 = vpack.c.b16 %v138, %v137
  %v149 = vpack.c.b16 %v140, %v139
  %v150 = vpack.c.b16 %v142, %v141
  %159 = vmatprep.subr.bf16.mxu0 0
  %160 = vmatpush1.bf16.msra.mxu0 %v143
  %161 = vmatprep.subr.bf16.mxu0 0
  %162 = vmatpush1.bf16.msra.mxu0 %v144
  %163 = vmatprep.subr.bf16.mxu0 0
  %164 = vmatpush1.bf16.msra.mxu0 %v145
  %165 = vmatprep.subr.bf16.mxu0 0
  %166 = vmatpush1.bf16.msra.mxu0 %v146
  %167 = vmatprep.subr.bf16.mxu0 0
  %168 = vmatpush1.bf16.msra.mxu0 %v147
  %169 = vmatprep.subr.bf16.mxu0 0
  %170 = vmatpush1.bf16.msra.mxu0 %v148
  %171 = vmatprep.subr.bf16.mxu0 0
  %172 = vmatpush1.bf16.msra.mxu0 %v149
  %173 = vmatprep.subr.bf16.mxu0 0
  %174 = vmatpush1.bf16.msra.mxu0 %v150
  %175 = vmatprep.subr.bf16.mxu0 0
  %176 = vmatpush1.bf16.msra.mxu0 0
  %177 = vmatprep.subr.bf16.mxu0 0
  %178 = vmatpush1.bf16.msra.mxu0 0
  %179 = vmatprep.subr.bf16.mxu0 0
  %180 = vmatpush1.bf16.msra.mxu0 0
  %181 = vmatprep.subr.bf16.mxu0 0
  %182 = vmatpush1.bf16.msra.mxu0 0
  %183 = vmatprep.subr.bf16.mxu0 0
  %184 = vmatpush1.bf16.msra.mxu0 0
  %185 = vmatprep.subr.bf16.mxu0 0
  %186 = vmatpush1.bf16.msra.mxu0 0
  %187 = vmatprep.subr.bf16.mxu0 0
  %188 = vmatpush1.bf16.msra.mxu0 0
  %189 = vmatprep.subr.bf16.mxu0 0
  %190 = vmatpush1.bf16.msra.mxu0 0
  %191 = vmatprep.mubr.bf16.mxu0 0
  %192 = vmatmul.mubr.bf16.gmra.mrb[0].mxu0 %v95
  %v193 = vpop.f32.mrb[0].mxu0
  %v194 = vadd.f32 0.0, %v193
  %v195 = vpop.f32.mrb[0].mxu0
  %v196 = vpop.f32.mrb[0].mxu0
  %v197 = vadd.f32 0.0, %v196
  %v198 = vpop.f32.mrb[0].mxu0
  %199 = vmatprep.mubr.bf16.mxu0 0
  %200 = vmatmul.mubr.bf16.gmra.mrb[0].mxu0 %v96
  %v201 = vpop.f32.mrb[0].mxu0
  %v202 = vadd.f32 0.0, %v201
  %v203 = vpop.f32.mrb[0].mxu0
  %v204 = vpop.f32.mrb[0].mxu0
  %v205 = vadd.f32 0.0, %v204
  %v206 = vpop.f32.mrb[0].mxu0
  %207 = vmatprep.mubr.bf16.mxu0 0
  %208 = vmatmul.mubr.bf16.gmra.mrb[0].mxu0 %v97
  %v209 = vpop.f32.mrb[0].mxu0
  %v210 = vadd.f32 0.0, %v209
  %v211 = vpop.f32.mrb[0].mxu0
  %v212 = vpop.f32.mrb[0].mxu0
  %v213 = vadd.f32 0.0, %v212
  %v214 = vpop.f32.mrb[0].mxu0
  %215 = vmatprep.mubr.bf16.mxu0 0
  %216 = vmatmul.mubr.bf16.gmra.mrb[0].mxu0 %v98
  %v217 = vpop.f32.mrb[0].mxu0
  %v218 = vadd.f32 0.0, %v217
  %v219 = vpop.f32.mrb[0].mxu0
  %v220 = vpop.f32.mrb[0].mxu0
  %v221 = vadd.f32 0.0, %v220
  %v222 = vpop.f32.mrb[0].mxu0
  %223 = vmatprep.mubr.bf16.mxu0 0
  %224 = vmatmul.mubr.bf16.gmra.mrb[0].mxu0 %v99
  %v225 = vpop.f32.mrb[0].mxu0
  %v226 = vadd.f32 0.0, %v225
  %v227 = vpop.f32.mrb[0].mxu0
  %v228 = vpop.f32.mrb[0].mxu0
  %v229 = vadd.f32 0.0, %v228
  %v230 = vpop.f32.mrb[0].mxu0
  %231 = vmatprep.mubr.bf16.mxu0 0
  %232 = vmatmul.mubr.bf16.gmra.mrb[0].mxu0 %v100
  %v233 = vpop.f32.mrb[0].mxu0
  %v234 = vadd.f32 0.0, %v233
  %v235 = vpop.f32.mrb[0].mxu0
  %v236 = vpop.f32.mrb[0].mxu0
  %v237 = vadd.f32 0.0, %v236
  %v238 = vpop.f32.mrb[0].mxu0
  %239 = vmatprep.mubr.bf16.mxu0 0
  %240 = vmatmul.mubr.bf16.gmra.mrb[0].mxu0 %v101
  %v241 = vpop.f32.mrb[0].mxu0
  %v242 = vadd.f32 0.0, %v241
  %v243 = vpop.f32.mrb[0].mxu0
  %v244 = vpop.f32.mrb[0].mxu0
  %v245 = vadd.f32 0.0, %v244
  %v246 = vpop.f32.mrb[0].mxu0
  %247 = vmatprep.mubr.bf16.mxu0 0
  %248 = vmatmul.mubr.bf16.gmra.mrb[0].mxu0 %v102
  %v249 = vpop.f32.mrb[0].mxu0
  %v250 = vadd.f32 0.0, %v249
  %v251 = vpop.f32.mrb[0].mxu0
  %v252 = vpop.f32.mrb[0].mxu0
  %v253 = vadd.f32 0.0, %v252
  %v254 = vpop.f32.mrb[0].mxu0
  %255 = vdwg.mxu0
  %v256 = vmax.f32 %v194, %v210
  %v257 = vmax.f32 %v197, %v213
  %v258 = vmax.f32 %v202, %v218
  %v259 = vmax.f32 %v205, %v221
  %v260 = vmax.f32 %v256, %v226
  %v261 = vmax.f32 %v257, %v229
  %v262 = vmax.f32 %v258, %v234
  %v263 = vmax.f32 %v259, %v237
  %v264 = vmax.f32 %v260, %v242
  %v265 = vmax.f32 %v261, %v245
  %v266 = vmax.f32 %v262, %v250
  %v267 = vmax.f32 %v263, %v253
  %v268 = vmax.f32 %v264, %v265
  %v269 = vmax.f32 %v266, %v267
  %v270 = vmax.f32 %v268, %v269
  %271 = vmatprep.subr.mxu0 0.0
  %272 = vmatpush1.msra.mxu0 %v31
  %273 = vmatprep.subr.mxu0 0.0
  %274 = vmatpush1.msra.mxu0 %v32
  %275 = vmatprep.subr.mxu0 0.0
  %276 = vmatpush1.msra.mxu0 %v33
  %277 = vmatprep.subr.mxu0 0.0
  %278 = vmatpush1.msra.mxu0 %v34
  %279 = vmatprep.subr.mxu0 0.0
  %280 = vmatpush1.msra.mxu0 %v35
  %281 = vmatprep.subr.mxu0 0.0
  %282 = vmatpush1.msra.mxu0 %v36
  %283 = vmatprep.subr.mxu0 0.0
  %284 = vmatpush1.msra.mxu0 %v37
  %285 = vmatprep.subr.mxu0 0.0
  %286 = vmatpush1.msra.mxu0 %v38
  %287 = vmatprep.subr.mxu0 0.0
  %288 = vmatpush1.msra.mxu0 %v39
  %289 = vmatprep.subr.mxu0 0.0
  %290 = vmatpush1.msra.mxu0 %v40
  %291 = vmatprep.subr.mxu0 0.0
  %292 = vmatpush1.msra.mxu0 %v41
  %293 = vmatprep.subr.mxu0 0.0
  %294 = vmatpush1.msra.mxu0 %v42
  %295 = vmatprep.subr.mxu0 0.0
  %296 = vmatpush1.msra.mxu0 %v43
  %297 = vmatprep.subr.mxu0 0.0
  %298 = vmatpush1.msra.mxu0 %v44
  %299 = vmatprep.subr.mxu0 0.0
  %300 = vmatpush1.msra.mxu0 %v45
  %301 = vmatprep.subr.mxu0 0.0
  %302 = vmatpush1.msra.mxu0 %v46
  %303 = vmatprep.subr.mxu0 0.0
  %304 = vmatpush1.msra.mxu0 0.0
  %305 = vmatprep.subr.mxu0 0.0
  %306 = vmatpush1.msra.mxu0 0.0
  %307 = vmatprep.subr.mxu0 0.0
  %308 = vmatpush1.msra.mxu0 0.0
  %309 = vmatprep.subr.mxu0 0.0
  %310 = vmatpush1.msra.mxu0 0.0
  %311 = vmatprep.subr.mxu0 0.0
  %312 = vmatpush1.msra.mxu0 0.0
  %313 = vmatprep.subr.mxu0 0.0
  %314 = vmatpush1.msra.mxu0 0.0
  %315 = vmatprep.subr.mxu0 0.0
  %316 = vmatpush1.msra.mxu0 0.0
  %317 = vmatprep.subr.mxu0 0.0
  %318 = vmatpush1.msra.mxu0 0.0
  %319 = vmatprep.subr.mxu0 0.0
  %320 = vmatpush1.msra.mxu0 0.0
  %321 = vmatprep.subr.mxu0 0.0
  %322 = vmatpush1.msra.mxu0 0.0
  %323 = vmatprep.subr.mxu0 0.0
  %324 = vmatpush1.msra.mxu0 0.0
  %325 = vmatprep.subr.mxu0 0.0
  %326 = vmatpush1.msra.mxu0 0.0
  %327 = vmatprep.subr.mxu0 0.0
  %328 = vmatpush1.msra.mxu0 0.0
  %329 = vmatprep.subr.mxu0 0.0
  %330 = vmatpush1.msra.mxu0 0.0
  %331 = vmatprep.subr.mxu0 0.0
  %332 = vmatpush1.msra.mxu0 0.0
  %333 = vmatprep.subr.mxu0 0.0
  %334 = vmatpush1.msra.mxu0 0.0
  %335 = vmatprep.mubr.f32.mxu0 0.0
  %336 = vmatmul.mubr.f32.gmra.mrb[0].mxu0 %v270
  %v337 = vpop.f32.mrb[0].mxu0
  %v338 = vadd.f32 0.0, %v337
  %v339 = vpop.f32.mrb[0].mxu0
  %340 = vdwg.mxu0
  %vm341 = vcmask 15360
  %342 = vst.msk [vmem:[%s3] sm:$0xff] %vm341, %v338
  // Predicated region
  $region14: #{tpu_custom_call.1} parent=0 // pred_check
    _
  $region15: #{tpu_custom_call.1} parent=0 // pred_check_branch
    %344 = sbr.rel (0) target = $region17
  $region16: #{tpu_custom_call.1} parent=0 // pred_region
    _
  $region17: #{tpu_custom_call.1} parent=0 // pred_fallthru
    _
  // Predicated region
  $region18: #{tpu_custom_call.1} parent=0 // pred_check
    _
  $region19: #{tpu_custom_call.1} parent=0 // pred_check_branch
    %346 = sbr.rel (0) target = $region21
  $region20: #{tpu_custom_call.1} parent=0 // pred_region
    _
  $region21: #{tpu_custom_call.1} parent=0 // pred_fallthru
    _

</llo_original>
